<compile_context>
chip_gen: v5e
topology: v5e:2x2
jax: 0.10.0
libtpu: 0.0.40
codegen_flags: <defaults>
</compile_context>

<pallas_src>
import functools
import math

import jax
import jax.numpy as jnp
from jax.experimental import pallas as pl
from jax.experimental.pallas import tpu as pltpu


# ----------------------------- small helpers --------------------------------

def _layernorm_f32(y, gamma, beta, eps):
    """Single-pass LayerNorm over the last axis (f32 statistics)."""
    mu = jnp.mean(y, axis=-1, keepdims=True)
    var = jnp.mean(y * y, axis=-1, keepdims=True) - mu * mu
    return (y - mu) * jax.lax.rsqrt(var + eps) * gamma + beta


def _pick_row_tile(m):
    """Largest bf16-friendly row tile that divides m."""
    for t in (512, 256, 128, 64, 32, 16, 8):
        if m % t == 0:
            return t
    return m


# ----------------------------- Pallas kernels -------------------------------

def _emb_ln_kernel(x_ref, g_ref, b_ref, o_ref, *, eps):
    """Embedding LayerNorm (no residual)."""
    x = x_ref[...].astype(jnp.float32)
    o_ref[...] = _layernorm_f32(x, g_ref[...], b_ref[...], eps).astype(o_ref.dtype)


def pallas_embedding_layernorm(x, gamma, beta, tm, eps=1e-12,
                               out_dtype=jnp.bfloat16):
    M, H = x.shape
    return pl.pallas_call(
        functools.partial(_emb_ln_kernel, eps=eps),
        out_shape=jax.ShapeDtypeStruct((M, H), out_dtype),
        grid=(M // tm,),
        in_specs=[
            pl.BlockSpec((tm, H), lambda i: (i, 0)),
            pl.BlockSpec((1, H), lambda i: (0, 0)),
            pl.BlockSpec((1, H), lambda i: (0, 0)),
        ],
        out_specs=pl.BlockSpec((tm, H), lambda i: (i, 0)),
        compiler_params=pltpu.CompilerParams(dimension_semantics=("parallel",)),
    )(x, gamma, beta)


def _encoder_layer_math(x_ref, mask_ref, wq_ref, bq_ref, wk_ref, bk_ref,
                        wv_ref, bv_ref, wo_ref, bo_ref, g1_ref, b1_ref,
                        wi_ref, bi_ref, wo2_ref, bo2_ref, g2_ref, b2_ref, *,
                        scale, eps, num_heads, cls_only):
    """One fused BERT encoder layer for a single batch element.

    x_ref block: (1, S, H) bf16; mask_ref block: (1, 1, S) additive f32.
    Per-head weights: wq/wk/wv (nH, H, Dh), wo (nH, Dh, H), all VMEM-resident.
    Returns post-LN2 hidden state, (S, H) f32 — or (1, H) f32 if cls_only
    (only the CLS row is propagated through attn-out / LN / FFN).
    """
    x = x_ref[0]                               # (S, H) bf16
    mask = mask_ref[0]                         # (1, S) f32 additive mask
    xf = x.astype(jnp.float32)

    if cls_only:
        xq = x[0:1]                            # only CLS query row needed
        resid = xf[0:1]
    else:
        xq = x
        resid = xf

    # residual + output-projection bias, accumulated in f32
    attn = resid + bo_ref[...]                 # (rows, H) f32

    for h in range(num_heads):                 # unrolled; heads stay in-kernel
        q = (jnp.dot(xq, wq_ref[h], preferred_element_type=jnp.float32)
             + bq_ref[h]).astype(jnp.bfloat16)                      # (rows, Dh)
        k = (jnp.dot(x, wk_ref[h], preferred_element_type=jnp.float32)
             + bk_ref[h]).astype(jnp.bfloat16)                      # (S, Dh)
        v = (jnp.dot(x, wv_ref[h], preferred_element_type=jnp.float32)
             + bv_ref[h]).astype(jnp.bfloat16)                      # (S, Dh)

        s = jnp.einsum("qd,kd->qk", q, k,
                       preferred_element_type=jnp.float32) * scale + mask
        s = s - jnp.max(s, axis=-1, keepdims=True)
        p = jnp.exp(s)
        p = p * pl.reciprocal(jnp.sum(p, axis=-1, keepdims=True), approx=True)

        ctx = jnp.dot(p.astype(jnp.bfloat16), v,
                      preferred_element_type=jnp.float32)           # (rows, Dh)
        attn = attn + jnp.dot(ctx.astype(jnp.bfloat16), wo_ref[h],
                              preferred_element_type=jnp.float32)   # (rows, H)

    h1 = _layernorm_f32(attn, g1_ref[...], b1_ref[...], eps)        # (rows, H)

    # --- FFN, consumed directly from VMEM (no HBM round trip) ---
    t = (jnp.dot(h1.astype(jnp.bfloat16), wi_ref[...],
                 preferred_element_type=jnp.float32) + bi_ref[...])  # (rows, I)
    # TODO(synk): HF BERT uses erf-GELU; tanh approximation used here.
    t = 0.5 * t * (1.0 + jnp.tanh(0.7978845608028654 * (t + 0.044715 * t * t * t)))
    t = t.astype(jnp.bfloat16)                 # keep intermediate bf16 (VMEM)
    y = (jnp.dot(t, wo2_ref[...], preferred_element_type=jnp.float32)
         + bo2_ref[...] + h1)
    return _layernorm_f32(y, g2_ref[...], b2_ref[...], eps)


def _encoder_layer_kernel(x_ref, mask_ref, wq_ref, bq_ref, wk_ref, bk_ref,
                          wv_ref, bv_ref, wo_ref, bo_ref, g1_ref, b1_ref,
                          wi_ref, bi_ref, wo2_ref, bo2_ref, g2_ref, b2_ref,
                          o_ref, *, scale, eps, num_heads):
    h2 = _encoder_layer_math(
        x_ref, mask_ref, wq_ref, bq_ref, wk_ref, bk_ref, wv_ref, bv_ref,
        wo_ref, bo_ref, g1_ref, b1_ref, wi_ref, bi_ref, wo2_ref, bo2_ref,
        g2_ref, b2_ref, scale=scale, eps=eps, num_heads=num_heads,
        cls_only=False)
    o_ref[0] = h2.astype(o_ref.dtype)


def _final_layer_kernel(x_ref, mask_ref, wq_ref, bq_ref, wk_ref, bk_ref,
                        wv_ref, bv_ref, wo_ref, bo_ref, g1_ref, b1_ref,
                        wi_ref, bi_ref, wo2_ref, bo2_ref, g2_ref, b2_ref,
                        wcls_ref, bcls_ref, logits_ref, *, scale, eps,
                        num_heads):
    """Last encoder layer fused with the classifier head (CLS row only)."""
    h2 = _encoder_layer_math(
        x_ref, mask_ref, wq_ref, bq_ref, wk_ref, bk_ref, wv_ref, bv_ref,
        wo_ref, bo_ref, g1_ref, b1_ref, wi_ref, bi_ref, wo2_ref, bo2_ref,
        g2_ref, b2_ref, scale=scale, eps=eps, num_heads=num_heads,
        cls_only=True)                                           # (1, H) f32
    logits_ref[0] = (jnp.dot(h2.astype(jnp.bfloat16), wcls_ref[...],
                             preferred_element_type=jnp.float32)
                     + bcls_ref[...])


# ----------------------------- call wrappers ---------------------------------

def _layer_weight_args(layer):
    return (layer["wq"], layer["bq"], layer["wk"], layer["bk"],
            layer["wv"], layer["bv"], layer["wo"], layer["bo"],
            layer["ln1_g"], layer["ln1_b"], layer["wi"], layer["bi"],
            layer["wo2"], layer["bo2"], layer["ln2_g"], layer["ln2_b"])


def _layer_in_specs(S, H, layer):
    specs = [
        pl.BlockSpec((1, S, H), lambda b: (b, 0, 0)),   # x (per-batch block)
        pl.BlockSpec((1, 1, S), lambda b: (b, 0, 0)),   # additive mask
    ]
    # Weights: full-array blocks with constant index_map -> DMA'd once,
    # VMEM-resident across the whole batch grid.
    for w in _layer_weight_args(layer):
        specs.append(pl.BlockSpec(w.shape, lambda b, nd=w.ndim: (0,) * nd))
    return specs


def pallas_encoder_layer(h3, mask, layer, cfg, eps=1e-12):
    B, S, H = h3.shape
    nH = cfg["heads"]
    Dh = H // nH
    return pl.pallas_call(
        functools.partial(_encoder_layer_kernel, scale=1.0 / math.sqrt(Dh),
                          eps=eps, num_heads=nH),
        out_shape=jax.ShapeDtypeStruct((B, S, H), h3.dtype),
        grid=(B,),
        in_specs=_layer_in_specs(S, H, layer),
        out_specs=pl.BlockSpec((1, S, H), lambda b: (b, 0, 0)),
        compiler_params=pltpu.CompilerParams(dimension_semantics=("parallel",)),
    )(h3, mask, *_layer_weight_args(layer))


def pallas_final_layer_and_classifier(h3, mask, layer, w_cls, b_cls, cfg,
                                      eps=1e-12):
    B, S, H = h3.shape
    nH = cfg["heads"]
    Dh = H // nH
    Np = w_cls.shape[1]                        # lane-padded classifier width
    in_specs = (_layer_in_specs(S, H, layer)
                + [pl.BlockSpec((H, Np), lambda b: (0, 0)),
                   pl.BlockSpec((1, Np), lambda b: (0, 0))])
    out = pl.pallas_call(
        functools.partial(_final_layer_kernel, scale=1.0 / math.sqrt(Dh),
                          eps=eps, num_heads=nH),
        out_shape=jax.ShapeDtypeStruct((B, 1, Np), jnp.float32),
        grid=(B,),
        in_specs=in_specs,
        out_specs=pl.BlockSpec((1, 1, Np), lambda b: (b, 0, 0)),
        compiler_params=pltpu.CompilerParams(dimension_semantics=("parallel",)),
    )(h3, mask, *_layer_weight_args(layer), w_cls, b_cls)
    return out.reshape(B, Np)


# ----------------------------- model wrapper ---------------------------------

CONFIG = dict(
    vocab_size=64,
    type_vocab_size=2,
    max_position=32,
    hidden=128,        # real bert-base-chinese: 768
    heads=4,           # real: 12
    intermediate=512,  # real: 3072
    layers=2,          # real: 12
    output_size=5,
)


def init_params(key, cfg):
    H, I, nH = cfg["hidden"], cfg["intermediate"], cfg["heads"]
    Dh = H // nH
    std = 0.02
    n_keys = 3 + 6 * cfg["layers"] + 1
    keys = iter(jax.random.split(key, n_keys))

    def w_bf16(kk, shape):
        return (jax.random.normal(kk, shape, jnp.float32) * std).astype(jnp.bfloat16)

    params = {
        "word_emb": w_bf16(next(keys), (cfg["vocab_size"], H)),
        "pos_emb": w_bf16(next(keys), (cfg["max_position"], H)),
        "type_emb": w_bf16(next(keys), (cfg["type_vocab_size"], H)),
        "emb_ln_g": jnp.ones((1, H), jnp.float32),
        "emb_ln_b": jnp.zeros((1, H), jnp.float32),
        "layers": [],
    }

    def per_head_in(kk):
        # (H, H) dense weight -> per-head (nH, H, Dh) blocks (column-sliced)
        full = jax.random.normal(kk, (H, H), jnp.float32) * std
        return full.reshape(H, nH, Dh).transpose(1, 0, 2).astype(jnp.bfloat16)

    for _ in range(cfg["layers"]):
        layer = {}
        layer["wq"] = per_head_in(next(keys))
        layer["bq"] = jnp.zeros((nH, 1, Dh), jnp.float32)
        layer["wk"] = per_head_in(next(keys))
        layer["bk"] = jnp.zeros((nH, 1, Dh), jnp.float32)
        layer["wv"] = per_head_in(next(keys))
        layer["bv"] = jnp.zeros((nH, 1, Dh), jnp.float32)
        # attention output projection, row-sliced per head: (nH, Dh, H)
        wo_full = jax.random.normal(next(keys), (H, H), jnp.float32) * std
        layer["wo"] = wo_full.reshape(nH, Dh, H).astype(jnp.bfloat16)
        layer["bo"] = jnp.zeros((1, H), jnp.float32)
        layer["ln1_g"] = jnp.ones((1, H), jnp.float32)
        layer["ln1_b"] = jnp.zeros((1, H), jnp.float32)
        layer["wi"] = w_bf16(next(keys), (H, I))
        layer["bi"] = jnp.zeros((1, I), jnp.float32)
        layer["wo2"] = w_bf16(next(keys), (I, H))
        layer["bo2"] = jnp.zeros((1, H), jnp.float32)
        layer["ln2_g"] = jnp.ones((1, H), jnp.float32)
        layer["ln2_b"] = jnp.zeros((1, H), jnp.float32)
        params["layers"].append(layer)

    out_w = jax.random.normal(next(keys), (H, cfg["output_size"]), jnp.float32) * std
    # Lane-dense classifier output (pad to 128; use 256 multiples at real
    # bert-base size on v6e/v7x).
    n_pad = 128 * pl.cdiv(cfg["output_size"], 128)
    params["out_w"] = jnp.pad(
        out_w, ((0, 0), (0, n_pad - cfg["output_size"]))).astype(jnp.bfloat16)
    params["out_b"] = jnp.zeros((1, n_pad), jnp.float32)
    return params


def bert_base_linear_forward(params, input_ids, attention_mask, token_type_ids,
                             cfg=CONFIG):
    B, S = input_ids.shape
    H = cfg["hidden"]
    M = B * S

    # --- embeddings (table gathers stay in plain JAX glue) ---
    word = jnp.take(params["word_emb"], input_ids, axis=0).astype(jnp.float32)
    pos = params["pos_emb"][:S][None, :, :].astype(jnp.float32)
    tok = jnp.take(params["type_emb"], token_type_ids, axis=0).astype(jnp.float32)
    emb = (word + pos + tok).reshape(M, H)
    h = pallas_embedding_layernorm(emb, params["emb_ln_g"], params["emb_ln_b"],
                                   _pick_row_tile(M))            # (M, H) bf16
    h3 = h.reshape(B, S, H)

    # additive attention mask: 0 for keep, -1e9 for masked positions
    ext_mask = ((1.0 - attention_mask.astype(jnp.float32)) * -1e9).reshape(B, 1, S)

    layers = params["layers"]
    for layer in layers[:-1]:
        h3 = pallas_encoder_layer(h3, ext_mask, layer, cfg)
    # last encoder layer fused with the linear classifier (CLS row only)
    logits_pad = pallas_final_layer_and_classifier(
        h3, ext_mask, layers[-1], params["out_w"], params["out_b"], cfg)
    return logits_pad[:, :cfg["output_size"]]        # (B, output_size) f32


# ------------------------------------ main -----------------------------------

if __name__ == "__main__":
    cfg = CONFIG
    B, S = 2, 8

    root = jax.random.PRNGKey(0)
    k_ids, k_params = jax.random.split(root)

    input_ids = jax.random.randint(k_ids, (B, S), 0, cfg["vocab_size"], dtype=jnp.int32)
    attention_mask = jnp.ones((B, S), jnp.int32)
    token_type_ids = jnp.zeros((B, S), jnp.int32)

    params = init_params(k_params, cfg)

    logits = bert_base_linear_forward(params, input_ids, attention_mask,
                                      token_type_ids, cfg)
    logits = jax.block_until_ready(logits)

    assert logits.shape == (B, cfg["output_size"]), logits.shape
    assert bool(jnp.all(jnp.isfinite(logits)))
    print("KERNEL_OK")
</pallas_src>

<mosaic_0001>
module attributes {stable_mosaic.version = 11 : i64} {
  func.func @_emb_ln_kernel(%arg0: i32, %arg1: memref<16x128xf32, #tpu.memory_space<vmem>>, %arg2: memref<1x128xf32, #tpu.memory_space<vmem>>, %arg3: memref<1x128xf32, #tpu.memory_space<vmem>>, %arg4: memref<16x128xbf16, #tpu.memory_space<vmem>>) attributes {dimension_semantics = [#tpu.dimension_semantics<parallel>], iteration_bounds = array<i64: 1>, scalar_prefetch = 0 : i64, scratch_operands = 0 : i64, tpu.core_type = #tpu.core_type<tc>, window_params = [{transform_indices = @transform_0, window_bounds = array<i64: 16, 128>}, {pipeline_mode = #tpu.pipeline_mode<synchronous>, transform_indices = @transform_1, window_bounds = array<i64: 1, 128>}, {pipeline_mode = #tpu.pipeline_mode<synchronous>, transform_indices = @transform_2, window_bounds = array<i64: 1, 128>}, {transform_indices = @transform_3, window_bounds = array<i64: 16, 128>}]} {
    %c0 = arith.constant 0 : index
    %c0_0 = arith.constant 0 : index
    %0 = vector.load %arg1[%c0, %c0_0] : memref<16x128xf32, #tpu.memory_space<vmem>>, vector<16x128xf32>
    %c0_1 = arith.constant 0 : index
    %c0_2 = arith.constant 0 : index
    %1 = vector.load %arg2[%c0_1, %c0_2] : memref<1x128xf32, #tpu.memory_space<vmem>>, vector<1x128xf32>
    %c0_3 = arith.constant 0 : index
    %c0_4 = arith.constant 0 : index
    %2 = vector.load %arg3[%c0_3, %c0_4] : memref<1x128xf32, #tpu.memory_space<vmem>>, vector<1x128xf32>
    %cst = arith.constant dense<0.000000e+00> : vector<16xf32>
    %3 = vector.multi_reduction <add>, %0, %cst [1] : vector<16x128xf32> to vector<16xf32>
    %4 = vector.shape_cast %3 : vector<16xf32> to vector<16x1xf32>
    %cst_5 = arith.constant 1.280000e+02 : f32
    %5 = vector.broadcast %cst_5 : f32 to vector<16x1xf32>
    %6 = arith.divf %4, %5 : vector<16x1xf32>
    %7 = arith.mulf %0, %0 : vector<16x128xf32>
    %cst_6 = arith.constant dense<0.000000e+00> : vector<16xf32>
    %8 = vector.multi_reduction <add>, %7, %cst_6 [1] : vector<16x128xf32> to vector<16xf32>
    %9 = vector.shape_cast %8 : vector<16xf32> to vector<16x1xf32>
    %cst_7 = arith.constant 1.280000e+02 : f32
    %10 = vector.broadcast %cst_7 : f32 to vector<16x1xf32>
    %11 = arith.divf %9, %10 : vector<16x1xf32>
    %12 = arith.mulf %6, %6 : vector<16x1xf32>
    %13 = arith.subf %11, %12 : vector<16x1xf32>
    %14 = vector.broadcast %6 : vector<16x1xf32> to vector<16x128xf32>
    %15 = arith.subf %0, %14 : vector<16x128xf32>
    %cst_8 = arith.constant 9.99999996E-13 : f32
    %16 = vector.broadcast %cst_8 : f32 to vector<16x1xf32>
    %17 = arith.addf %13, %16 : vector<16x1xf32>
    %18 = math.rsqrt %17 : vector<16x1xf32>
    %19 = vector.broadcast %18 : vector<16x1xf32> to vector<16x128xf32>
    %20 = arith.mulf %15, %19 : vector<16x128xf32>
    %21 = vector.broadcast %1 : vector<1x128xf32> to vector<16x128xf32>
    %22 = arith.mulf %20, %21 : vector<16x128xf32>
    %23 = vector.broadcast %2 : vector<1x128xf32> to vector<16x128xf32>
    %24 = arith.addf %22, %23 : vector<16x128xf32>
    %25 = arith.truncf %24 : vector<16x128xf32> to vector<16x128xbf16>
    %c0_9 = arith.constant 0 : index
    %c0_10 = arith.constant 0 : index
    %26 = vector.load %arg4[%c0_9, %c0_10] : memref<16x128xbf16, #tpu.memory_space<vmem>>, vector<16x128xbf16>
    tpu.vector_store %arg4[%c0_9, %c0_10], %25 {strides = array<i32>} : memref<16x128xbf16, #tpu.memory_space<vmem>>, vector<16x128xbf16>,
    return
  }
  func.func @transform_0(%arg0: i32) -> (i32, i32) {
    %c0_i32 = arith.constant 0 : i32
    %c0_i32_0 = arith.constant 0 : i32
    return %arg0, %c0_i32 : i32, i32
  }
  func.func @transform_1(%arg0: i32) -> (i32, i32) {
    %c0_i32 = arith.constant 0 : i32
    %c0_i32_0 = arith.constant 0 : i32
    %c0_i32_1 = arith.constant 0 : i32
    return %c0_i32, %c0_i32_0 : i32, i32
  }
  func.func @transform_2(%arg0: i32) -> (i32, i32) {
    %c0_i32 = arith.constant 0 : i32
    %c0_i32_0 = arith.constant 0 : i32
    %c0_i32_1 = arith.constant 0 : i32
    return %c0_i32, %c0_i32_0 : i32, i32
  }
  func.func @transform_3(%arg0: i32) -> (i32, i32) {
    %c0_i32 = arith.constant 0 : i32
    %c0_i32_0 = arith.constant 0 : i32
    return %arg0, %c0_i32 : i32, i32
  }
}

</mosaic_0001>

<llo_original>
// kernel: tpu_custom_call.1
$region0: #{tpu_custom_call.1}
  #allocation0 [shape = 'u32[]', space=smem, size = 0x4, offset = 0x4, fixed_abs, tag = 'smem constant byte address 0x4 - core index']
  #allocation1 [shape = 'u32[72,128]{1,0:T(1,128)}', space=vmem, size = 0x9000, scoped, tag = 'internal scratch']
  %s0 = inlined_call_operand.hbm [shape: f32[16,128], index: 0, kind: input, shape index: {}]
  %s1 = inlined_call_operand.hbm [shape: f32[1,128], index: 1, kind: input, shape index: {}]
  %s2 = inlined_call_operand.vmem [shape: f32[1,128], index: 2, kind: input, shape index: {}]
  %s3 = inlined_call_operand.hbm [shape: bf16[16,128], index: 3, kind: output, shape index: {}]
  %s4 = sld [smem:[#allocation0]]
  $region30: #{tpu_custom_call.1} parent=0
    _
  %s6 = ssub.s32 1, %s4
  %s7 = scalar_select 0, %s6, %s4
  $region1: #{tpu_custom_call.1} parent=0
    #allocation2 [shape = 'u8[8192]{0}', space=vmem, size = 0x2000, scoped, tag = 'input window, operand 0, single buffered']
    #allocation3 [shape = 's32[1]{0}', space=sflag, size = 0x4, scoped, tag = 'scoped memory for tpu_custom_call.1']
    #allocation4 [shape = 's32[1]{0}', space=sflag, size = 0x4, scoped, tag = 'scoped memory for tpu_custom_call.1']
    #allocation5 [shape = 'u8[512]{0}', space=vmem, size = 0x400, scoped, tag = 'input window, operand 1, single buffered']
    #allocation6 [shape = 's32[1]{0}', space=sflag, size = 0x4, scoped, tag = 'scoped memory for tpu_custom_call.1']
    #allocation7 [shape = 'u8[4096]{0}', space=vmem, size = 0x1000, scoped, tag = 'output window, operand 0, single buffered']
    %8 = vsyncpa [#allocation3], 0
    %9 = vsyncpa [#allocation6], 0
    %10 = vsyncpa [#allocation4], 0
    // Predicated region
    $region2: #{tpu_custom_call.1} parent=1 // pred_check
      _
    $region3: #{tpu_custom_call.1} parent=1 // pred_check_branch
      %12 = sbr.rel (0) target = $region5
    $region4: #{tpu_custom_call.1} parent=1 // pred_region
      %14 = vsyncadd [#allocation3], 0
      %s15 = sshll.u32 %s0, 4
      %s16 = int_to_ptr.hbm [resolvable:$true] %s15
      %s17 = sshll.u32 [#allocation2], 4
      %s18 = int_to_ptr.vmem [resolvable:$true] %s17
      %23 = dma.hbm_to_vmem [thread:$0]  %s16, 256, %s18, [#allocation3], 128, 128, 8
    $region5: #{tpu_custom_call.1} parent=1 // pred_fallthru
      _
    // Predicated region
    $region6: #{tpu_custom_call.1} parent=1 // pred_check
      _
    $region7: #{tpu_custom_call.1} parent=1 // pred_check_branch
      %25 = sbr.rel (0) target = $region9
    $region8: #{tpu_custom_call.1} parent=1 // pred_region
      %27 = vsyncadd [#allocation6], 0
      %s29 = sshll.u32 %s1, 4
      %s30 = int_to_ptr.hbm [resolvable:$true] %s29
      %s31 = sshll.u32 [#allocation5], 4
      %s32 = int_to_ptr.vmem [resolvable:$true] %s31
      %34 = dma.hbm_to_vmem [thread:$0]  %s30, 16, %s32, [#allocation6]
    $region9: #{tpu_custom_call.1} parent=1 // pred_fallthru
      _
    // Predicated region
    $region10: #{tpu_custom_call.1} parent=1 // pred_check
      _
    $region11: #{tpu_custom_call.1} parent=1 // pred_check_branch
      %36 = sbr.rel (0) target = $region13
    $region12: #{tpu_custom_call.1} parent=1 // pred_region
      _
    $region13: #{tpu_custom_call.1} parent=1 // pred_fallthru
      _
    // Predicated region
    $region14: #{tpu_custom_call.1} parent=1 // pred_check
      _
    $region15: #{tpu_custom_call.1} parent=1 // pred_check_branch
      %38 = sbr.rel (0) target = $region17
    $region16: #{tpu_custom_call.1} parent=1 // pred_region
      %40 = dma.done [#allocation3], 256
    $region17: #{tpu_custom_call.1} parent=1 // pred_fallthru
      _
    // Predicated region
    $region18: #{tpu_custom_call.1} parent=1 // pred_check
      _
    $region19: #{tpu_custom_call.1} parent=1 // pred_check_branch
      %42 = sbr.rel (0) target = $region21
    $region20: #{tpu_custom_call.1} parent=1 // pred_region
      %44 = dma.done [#allocation6], 16
    $region21: #{tpu_custom_call.1} parent=1 // pred_fallthru
      _
    %v45 = vld [vmem:[#allocation2] sm:$0xff]
    %v46 = vld [vmem:[#allocation2 + $0x8] sm:$0xff]
    %v47 = vld [vmem:[#allocation5] sm:$0x1]
    %v48 = vld [vmem:[%s2] sm:$0x1]
    %49 = vadd.xlane.f32.xlu0 %v45
    %v50 = vpop.xlane.xlu0 %49
    %51 = vadd.xlane.f32.xlu0 %v46
    %v52 = vpop.xlane.xlu0 %51
    %v53 = vrcp.pop 128.0
    %v54 = vmul.f32 128.0, %v53
    %v55 = vsub.f32 1.0, %v54
    %v56 = vmul.f32 %v53, %v55
    %v57 = vadd.f32 %v53, %v56
    %vm58 = vweird.f32 %v53
    %v59 = vsel %vm58, %v53, %v57
    %v60 = vmul.f32 %v50, %v59
    %v61 = vmul.f32 %v52, %v59
    %v62 = vmul.f32 %v45, %v45
    %v63 = vmul.f32 %v46, %v46
    %64 = vadd.xlane.f32.xlu0 %v62
    %v65 = vpop.xlane.xlu0 %64
    %66 = vadd.xlane.f32.xlu0 %v63
    %v67 = vpop.xlane.xlu0 %66
    %v68 = vmul.f32 %v65, %v59
    %v69 = vmul.f32 %v67, %v59
    %v70 = vmul.f32 %v60, %v60
    %v71 = vmul.f32 %v61, %v61
    %v72 = vsub.f32 %v68, %v70
    %v73 = vsub.f32 %v69, %v71
    %v74 = vsub.f32 %v45, %v60
    %v75 = vsub.f32 %v46, %v61
    %v76 = vadd.f32 %v72, 1e-12
    %v77 = vadd.f32 %v73, 1e-12
    %v78 = vrsqrt.pop %v76
    %v79 = vmul.f32 %v78, %v76
    %v80 = vmul.f32 %v79, %v78
    %v81 = vmul.f32 0.5, %v80
    %v82 = vsub.f32 1.5, %v81
    %v83 = vmul.f32 %v78, %v82
    %vm84 = vweird.f32 %v76
    %vm85 = vweird.f32 %v78
    %vm86 = vmor %vm84, %vm85
    %v87 = vsel %vm86, %v78, %v83
    %v88 = vrsqrt.pop %v77
    %v89 = vmul.f32 %v88, %v77
    %v90 = vmul.f32 %v89, %v88
    %v91 = vmul.f32 0.5, %v90
    %v92 = vsub.f32 1.5, %v91
    %v93 = vmul.f32 %v88, %v92
    %vm94 = vweird.f32 %v77
    %vm95 = vweird.f32 %v88
    %vm96 = vmor %vm94, %vm95
    %v97 = vsel %vm96, %v88, %v93
    %v98 = vmul.f32 %v74, %v87
    %v99 = vmul.f32 %v75, %v97
    %v101 = vperm.slane %v47, 0
    %v103 = vmul.f32 %v98, %v101
    %v104 = vmul.f32 %v99, %v101
    %v106 = vperm.slane %v48, 0
    %v108 = vadd.f32 %v103, %v106
    %v109 = vadd.f32 %v104, %v106
    %v110 = vpack.c.bf16 %v108, %v108
    %v111 = vpack.c.bf16 %v109, %v109
    %112 = vst [vmem:[#allocation7] sm:$0xf] %v110
    %113 = vst [vmem:[#allocation7 + $0x4] sm:$0xf] %v111
    // Predicated region
    $region22: #{tpu_custom_call.1} parent=1 // pred_check
      _
    $region23: #{tpu_custom_call.1} parent=1 // pred_check_branch
      %115 = sbr.rel (0) target = $region25
    $region24: #{tpu_custom_call.1} parent=1 // pred_region
      %117 = vsyncadd [#allocation4], 0
      %s118 = sshll.u32 [#allocation7], 4
      %s119 = int_to_ptr.vmem [resolvable:$true] %s118
      %s120 = sshll.u32 %s3, 4
      %s121 = int_to_ptr.hbm [resolvable:$true] %s120
      %126 = dma.vmem_to_hbm [thread:$0]  %s119, 128, %s121, [#allocation4], 64, 64, 4
    $region25: #{tpu_custom_call.1} parent=1 // pred_fallthru
      _
    // Predicated region
    $region26: #{tpu_custom_call.1} parent=1 // pred_check
      _
    $region27: #{tpu_custom_call.1} parent=1 // pred_check_branch
      %128 = sbr.rel (0) target = $region29
    $region28: #{tpu_custom_call.1} parent=1 // pred_region
      %130 = dma.done [#allocation4], 128
    $region29: #{tpu_custom_call.1} parent=1 // pred_fallthru
      _
    %131 = vsyncpa [#allocation3], 1
    %132 = vsyncpa [#allocation6], 1
    %133 = vsyncpa [#allocation4], 1

</llo_original>
